<compile_context>
chip_gen: v6e
topology: v6e:2x2x1
jax: 0.10.0
libtpu: 0.0.40
codegen_flags: <defaults>
</compile_context>

<pallas_src>
import functools

import jax
import jax.numpy as jnp
from jax import lax
from jax.experimental import pallas as pl
from jax.experimental.pallas import tpu as pltpu

_SUB = 8                      # sublane tile
_LANE = 128                   # lane tile
_TILE = _SUB * _LANE          # 1024-element alignment granularity
_BLOCK_ROWS_MAX = 4096        # 4096x128 f32 = 2 MiB/block; 2 inputs x 2 bufs = 8 MiB
_NUM_CORES = 2                # shard the reduction across TensorCores (megacore)


def _rmse_kernel(yhat_ref, y_ref, out_ref, acc_ref, *,
                 rows, block_rows, bpc, num_blocks, needs_mask):
    c = pl.program_id(0)      # "parallel" axis -> per-TensorCore shard
    i = pl.program_id(1)      # "arbitrary" axis -> sequential reduction per core

    @pl.when(i == 0)
    def _():
        acc_ref[...] = jnp.zeros_like(acc_ref)

    # Cast after the (native-dtype) load; arithmetic in f32.
    d = yhat_ref[...].astype(jnp.float32) - y_ref[...].astype(jnp.float32)
    d2 = d * d

    if needs_mask:
        gb = c * bpc + i                      # global (unclamped) block index
        rem = rows - gb * block_rows          # valid rows in this block (<=0 -> none)
        row_idx = lax.broadcasted_iota(jnp.int32, (block_rows, _LANE), 0)
        d2 = jnp.where(row_idx < rem, d2, 0.0)

    # VPU-only vreg adds into the (8, 128) vector accumulator; no per-step
    # cross-lane reduce or SMEM scalar round-trip on the critical path.
    acc_ref[...] += d2.reshape(block_rows // _SUB, _SUB, _LANE).sum(axis=0)

    @pl.when(i == bpc - 1)
    def _():
        out_ref[...] = jnp.sum(acc_ref[...]).reshape(1, 1, 1)


def rmse_loss(yhat, y, eps=1e-6, block_rows=None):
    """sqrt(sum((yhat - y)**2) + eps)  ==  torch.sqrt(MSELoss('sum')(yhat, y) + eps)."""
    assert yhat.shape == y.shape, "yhat and y must have the same shape"
    a = yhat.reshape(-1)
    b = y.reshape(-1)
    if a.dtype != b.dtype:
        dt = jnp.promote_types(a.dtype, b.dtype)
        a = a.astype(dt)
        b = b.astype(dt)
    n = a.shape[0]

    # Only pad when the flat size is not already (8*128)-aligned.
    # TODO(synk): for unaligned sizes this is one extra HBM pass per operand;
    # could be removed entirely with element-level masking on a 1-D layout.
    pad = (-n) % _TILE
    if pad:
        a = jnp.pad(a, (0, pad))
        b = jnp.pad(b, (0, pad))
    rows = (n + pad) // _LANE                 # always a multiple of 8

    a2 = a.reshape(rows, _LANE)
    b2 = b.reshape(rows, _LANE)

    if block_rows is None:
        block_rows = _BLOCK_ROWS_MAX
    block_rows = min(block_rows, rows)
    assert block_rows % _SUB == 0

    num_blocks = pl.cdiv(rows, block_rows)
    bpc = pl.cdiv(num_blocks, _NUM_CORES)     # blocks handled per core
    needs_mask = (rows % block_rows != 0) or (_NUM_CORES * bpc != num_blocks)

    def idx_map(c, i):
        # Clamp so ragged / over-split steps still DMA a valid block; their
        # contribution is zeroed by the in-kernel mask.
        return (jnp.minimum(c * bpc + i, num_blocks - 1), 0)

    kernel = functools.partial(
        _rmse_kernel, rows=rows, block_rows=block_rows, bpc=bpc,
        num_blocks=num_blocks, needs_mask=needs_mask)

    partials = pl.pallas_call(
        kernel,
        out_shape=jax.ShapeDtypeStruct((_NUM_CORES, 1, 1), jnp.float32),
        grid_spec=pltpu.PrefetchScalarGridSpec(
            num_scalar_prefetch=0,
            grid=(_NUM_CORES, bpc),
            in_specs=[
                pl.BlockSpec((block_rows, _LANE), idx_map),
                pl.BlockSpec((block_rows, _LANE), idx_map),
            ],
            out_specs=pl.BlockSpec((1, 1, 1), lambda c, i: (c, 0, 0)),
            scratch_shapes=[pltpu.VMEM((_SUB, _LANE), jnp.float32)],
        ),
        compiler_params=pltpu.CompilerParams(
            dimension_semantics=("parallel", "arbitrary"),
        ),
    )(a2, b2)

    return jnp.sqrt(jnp.sum(partials) + jnp.float32(eps))


if __name__ == "__main__":
    key = jax.random.PRNGKey(0)
    k1, k2, k3, k4, k5, k6 = jax.random.split(key, 6)

    # Primary example: small regression-style output (batch=2, ch=4, 16, 16).
    yhat = jax.random.normal(k1, (2, 4, 16, 16), dtype=jnp.float32)
    y = jax.random.normal(k2, (2, 4, 16, 16), dtype=jnp.float32)
    loss = rmse_loss(yhat, y, eps=1e-6)
    jax.block_until_ready(loss)
    ref = jnp.sqrt(jnp.sum((yhat - y) ** 2) + 1e-6)
    assert jnp.allclose(loss, ref, rtol=1e-5, atol=1e-5), (loss, ref)

    # Lane-unaligned shape (exercises the padded-tail path).
    yh2 = jax.random.normal(k3, (3, 5, 7), dtype=jnp.float32)
    y2 = jax.random.normal(k4, (3, 5, 7), dtype=jnp.float32)
    l2 = rmse_loss(yh2, y2)
    ref2 = jnp.sqrt(jnp.sum((yh2 - y2) ** 2) + 1e-6)
    assert jnp.allclose(l2, ref2, rtol=1e-5, atol=1e-5), (l2, ref2)

    # Multi-block reduction path: small block_rows forces accumulation across
    # grid steps plus a ragged 2-way core split (num_blocks=5, bpc=3).
    yh3 = jax.random.normal(k5, (40, 128), dtype=jnp.float32)
    y3 = jax.random.normal(k6, (40, 128), dtype=jnp.float32)
    l3 = rmse_loss(yh3, y3, block_rows=8)
    ref3 = jnp.sqrt(jnp.sum((yh3 - y3) ** 2) + 1e-6)
    assert jnp.allclose(l3, ref3, rtol=1e-5, atol=1e-5), (l3, ref3)

    jax.block_until_ready((l2, l3))
    print("KERNEL_OK")
</pallas_src>

<mosaic_0001>
module attributes {stable_mosaic.version = 11 : i64} {
  func.func @_rmse_kernel(%arg0: i32, %arg1: i32, %arg2: memref<16x128xf32, #tpu.memory_space<vmem>>, %arg3: memref<16x128xf32, #tpu.memory_space<vmem>>, %arg4: memref<1x1x1xf32, #tpu.memory_space<vmem>>, %arg5: memref<8x128xf32, #tpu.memory_space<vmem>>) attributes {dimension_semantics = [#tpu.dimension_semantics<parallel>, #tpu.dimension_semantics<arbitrary>], iteration_bounds = array<i64: 2, 1>, scalar_prefetch = 0 : i64, scratch_operands = 1 : i64, tpu.core_type = #tpu.core_type<tc>, window_params = [{transform_indices = @transform_0, window_bounds = array<i64: 16, 128>}, {transform_indices = @transform_1, window_bounds = array<i64: 16, 128>}, {transform_indices = @transform_2, window_bounds = array<i64: 1, 1, 1>}]} {
    %c0_i32 = arith.constant 0 : i32
    %0 = arith.cmpi eq, %arg1, %c0_i32 : i32
    %1 = arith.extui %0 : i1 to i32
    %c0_i32_0 = arith.constant 0 : i32
    %2 = arith.cmpi ne, %1, %c0_i32_0 : i32
    scf.if %2 {
      %cst_12 = arith.constant 0.000000e+00 : f32
      %24 = vector.broadcast %cst_12 : f32 to vector<8x128xf32>
      %c0_13 = arith.constant 0 : index
      %c0_14 = arith.constant 0 : index
      %25 = vector.load %arg5[%c0_13, %c0_14] : memref<8x128xf32, #tpu.memory_space<vmem>>, vector<8x128xf32>
      tpu.vector_store %arg5[%c0_13, %c0_14], %24 {strides = array<i32>} : memref<8x128xf32, #tpu.memory_space<vmem>>, vector<8x128xf32>,
    } else {
    }
    %c0 = arith.constant 0 : index
    %c0_1 = arith.constant 0 : index
    %3 = vector.load %arg2[%c0, %c0_1] : memref<16x128xf32, #tpu.memory_space<vmem>>, vector<16x128xf32>
    %c0_2 = arith.constant 0 : index
    %c0_3 = arith.constant 0 : index
    %4 = vector.load %arg3[%c0_2, %c0_3] : memref<16x128xf32, #tpu.memory_space<vmem>>, vector<16x128xf32>
    %5 = arith.subf %3, %4 : vector<16x128xf32>
    %6 = arith.mulf %5, %5 : vector<16x128xf32>
    %c1_i32 = arith.constant 1 : i32
    %7 = arith.muli %arg0, %c1_i32 : i32
    %8 = arith.addi %7, %arg1 : i32
    %c16_i32 = arith.constant 16 : i32
    %9 = arith.muli %8, %c16_i32 : i32
    %c16_i32_4 = arith.constant 16 : i32
    %10 = arith.subi %c16_i32_4, %9 : i32
    %11 = tpu.iota {dimensions = array<i32: 0>} : vector<16x128xi32>
    %12 = vector.broadcast %10 : i32 to vector<16x128xi32>
    %13 = arith.cmpi slt, %11, %12 : vector<16x128xi32>
    %cst = arith.constant 0.000000e+00 : f32
    %14 = vector.broadcast %cst : f32 to vector<16x128xf32>
    %15 = arith.select %13, %6, %14 : vector<16x128xi1>, vector<16x128xf32>
    %c0_5 = arith.constant 0 : index
    %c0_6 = arith.constant 0 : index
    %16 = vector.load %arg5[%c0_5, %c0_6] : memref<8x128xf32, #tpu.memory_space<vmem>>, vector<8x128xf32>
    %17 = vector.shape_cast %15 : vector<16x128xf32> to vector<2x8x128xf32>
    %cst_7 = arith.constant dense<0.000000e+00> : vector<8x128xf32>
    %18 = vector.multi_reduction <add>, %17, %cst_7 [0] : vector<2x8x128xf32> to vector<8x128xf32>
    %19 = arith.addf %16, %18 : vector<8x128xf32>
    %c0_8 = arith.constant 0 : index
    %c0_9 = arith.constant 0 : index
    %20 = vector.load %arg5[%c0_8, %c0_9] : memref<8x128xf32, #tpu.memory_space<vmem>>, vector<8x128xf32>
    tpu.vector_store %arg5[%c0_8, %c0_9], %19 {strides = array<i32>} : memref<8x128xf32, #tpu.memory_space<vmem>>, vector<8x128xf32>,
    %c0_i32_10 = arith.constant 0 : i32
    %21 = arith.cmpi eq, %arg1, %c0_i32_10 : i32
    %22 = arith.extui %21 : i1 to i32
    %c0_i32_11 = arith.constant 0 : i32
    %23 = arith.cmpi ne, %22, %c0_i32_11 : i32
    scf.if %23 {
      %c0_12 = arith.constant 0 : index
      %c0_13 = arith.constant 0 : index
      %24 = vector.load %arg5[%c0_12, %c0_13] : memref<8x128xf32, #tpu.memory_space<vmem>>, vector<8x128xf32>
      %25 = vector.shape_cast %24 : vector<8x128xf32> to vector<1x8x128xf32>
      %cst_14 = arith.constant dense<0.000000e+00> : vector<1xf32>
      %26 = vector.multi_reduction <add>, %25, %cst_14 [1, 2] : vector<1x8x128xf32> to vector<1xf32>
      %27 = vector.shape_cast %26 : vector<1xf32> to vector<1x1x1xf32>
      %28 = vector.extract %27[0, 0, 0] : f32 from vector<1x1x1xf32>
      %29 = vector.broadcast %28 : f32 to vector<1x1x1xf32>
      %c0_15 = arith.constant 0 : index
      %c0_16 = arith.constant 0 : index
      %c0_17 = arith.constant 0 : index
      %30 = vector.load %arg4[%c0_15, %c0_16, %c0_17] : memref<1x1x1xf32, #tpu.memory_space<vmem>>, vector<1x1x1xf32>
      tpu.vector_store %arg4[%c0_15, %c0_16, %c0_17], %29 {strides = array<i32>} : memref<1x1x1xf32, #tpu.memory_space<vmem>>, vector<1x1x1xf32>,
    } else {
    }
    return
  }
  func.func @transform_0(%arg0: i32, %arg1: i32) -> (i32, i32) {
    %c1_i32 = arith.constant 1 : i32
    %0 = arith.muli %arg0, %c1_i32 : i32
    %1 = arith.addi %0, %arg1 : i32
    %c0_i32 = arith.constant 0 : i32
    %2 = arith.minsi %1, %c0_i32 : i32
    %c0_i32_0 = arith.constant 0 : i32
    %c0_i32_1 = arith.constant 0 : i32
    return %2, %c0_i32_0 : i32, i32
  }
  func.func @transform_1(%arg0: i32, %arg1: i32) -> (i32, i32) {
    %c1_i32 = arith.constant 1 : i32
    %0 = arith.muli %arg0, %c1_i32 : i32
    %1 = arith.addi %0, %arg1 : i32
    %c0_i32 = arith.constant 0 : i32
    %2 = arith.minsi %1, %c0_i32 : i32
    %c0_i32_0 = arith.constant 0 : i32
    %c0_i32_1 = arith.constant 0 : i32
    return %2, %c0_i32_0 : i32, i32
  }
  func.func @transform_2(%arg0: i32, %arg1: i32) -> (i32, i32, i32) {
    %c0_i32 = arith.constant 0 : i32
    %c0_i32_0 = arith.constant 0 : i32
    %c0_i32_1 = arith.constant 0 : i32
    return %arg0, %c0_i32, %c0_i32_0 : i32, i32, i32
  }
}

</mosaic_0001>

<llo_original>
// kernel: tpu_custom_call.1
$region0: #{tpu_custom_call.1}
  #allocation0 [shape = 'u32[]', space=smem, size = 0x4, offset = 0x4, fixed_abs, tag = 'smem constant byte address 0x4 - core index']
  #allocation1 [shape = 'u32[144,128]{1,0:T(1,128)}', space=vmem, size = 0x12000, scoped, tag = 'internal scratch']
  #allocation2 [shape = 'f32[8,128]{1,0:T(8,128)}', space=vmem, size = 0x1000, scoped, tag = 'scratch operand']
  %s0 = inlined_call_operand.hbm [shape: f32[16,128], index: 0, kind: input, shape index: {}]
  %s1 = inlined_call_operand.hbm [shape: f32[16,128], index: 1, kind: input, shape index: {}]
  %s2 = inlined_call_operand.vmem [shape: f32[2,1,1], index: 2, kind: output, shape index: {}]
  %s3 = sld [smem:[#allocation0]]
  $region57: #{tpu_custom_call.1} parent=0
    _
  %s5 = ssub.s32 1, %s3
  %s6 = scalar_select 0, %s5, %s3
  $region1: #{tpu_custom_call.1} parent=0
    #allocation3 [shape = 'u8[16384]{0}', space=vmem, size = 0x4000, scoped, tag = 'input window, operand 0']
    #allocation4 [shape = 's32[2]{0}', space=sflag, size = 0x8, scoped, tag = 'scoped memory for tpu_custom_call.1']
    #allocation5 [shape = 'u8[16384]{0}', space=vmem, size = 0x4000, scoped, tag = 'input window, operand 1']
    #allocation6 [shape = 's32[2]{0}', space=sflag, size = 0x8, scoped, tag = 'scoped memory for tpu_custom_call.1']
    %7 = vsyncpa [#allocation4], 0
    %s8 = scalar_lea.sflag [#allocation4], 1
    %9 = vsyncpa %s8, 0
    %10 = vsyncpa [#allocation6], 0
    %s11 = scalar_lea.sflag [#allocation6], 1
    %12 = vsyncpa %s11, 0
    loop: start=0, step=1, limit=4
    $region2: #{tpu_custom_call.1} parent=1 // loop_pre_header
      _
    $region3: #{tpu_custom_call.1} parent=1 // loop_header
      %s14 = sphi 0, %s18
      %p15 = scmp.ge.s32.totalorder %s14, 4
      %s21 = sphi 0, %s33
      %s22 = sphi 0, %s29
      %s23 = sphi 0, %s21
      %s24 = sphi 0, %s22
      %s25 = sphi 0, %s23
      %s26 = sphi 0, %s24
      %s42 = sphi 0, %s44
      %s45 = sphi 0, %s42
      %s46 = sphi 0, %s45
      %s62 = sphi 0, %s46
      %s74 = sphi 0, %s76
      %s77 = sphi 0, %s74
      %s78 = sphi 0, %s77
      %s94 = sphi 0, %s78
      %s100 = sphi 0, %s102
      %s103 = sphi 0, %s100
      %s104 = sphi 0, %s103
      %s120 = sphi 0, %s104
    $region4: #{tpu_custom_call.1} parent=1 // loop_header_branch
      %17 = sbr.rel (%p15) target = $region8
    $region5: #{tpu_custom_call.1} parent=1 // loop_body
      %s19 = ssub.s32 %s14, 1
      %s20 = ssub.s32 %s14, 2
      %s27 = sadd.s32 1, %s22
      %p28 = scmp.ge.s32.totalorder %s27, 1
      %s29 = scalar_select %p28, 0, %s27
      %s30 = sadd.s32 1, %s21
      %s31 = scalar_select %p28, %s30, %s21
      %p32 = scmp.ge.s32.totalorder %s31, 2
      %s33 = scalar_select %p32, 0, %s31
      %s34 = sadd.s32 %s21, %s22
      %p35 = scmp.lt.s32.totalorder %s34, 0
      %s36 = scalar_select %p35, %s34, 0
      %s37 = sadd.s32 %s33, %s29
      %p38 = scmp.lt.s32.totalorder %s37, 0
      %s39 = scalar_select %p38, %s37, 0
      %s40 = ssub.s32 %s36, %s39
      %p41 = scmp.eq.s32.totalorder %s40, 0
      %s43 = sadd.s32 %s42, 1
      %s44 = scalar_select %p41, %s42, %s43
      %p47 = pneg %p41
      %p48 = scmp.eq.s32.totalorder %s14, 1
      %p49 = por %p47, %p48
      %p50 = scmp.ne.s32.totalorder %s42, %s45
      %p51 = scmp.eq.s32.totalorder %s14, 0
      %p52 = por %p50, %p51
      %p53 = scmp.ne.s32.totalorder %s42, %s45
      %p54 = scmp.eq.s32.totalorder %s19, 1
      %p55 = por %p53, %p54
      %p56 = scmp.ne.s32.totalorder %s45, %s46
      %p57 = scmp.eq.s32.totalorder %s19, 0
      %p58 = por %p56, %p57
      %p59 = scmp.ne.s32.totalorder %s45, %s46
      %p60 = scmp.eq.s32.totalorder %s20, 1
      %p61 = por %p59, %p60
      %p63 = scmp.ne.s32.totalorder %s46, %s62
      %p64 = scmp.eq.s32.totalorder %s20, 0
      %p65 = por %p63, %p64
      %s66 = sadd.s32 %s21, %s22
      %p67 = scmp.lt.s32.totalorder %s66, 0
      %s68 = scalar_select %p67, %s66, 0
      %s69 = sadd.s32 %s33, %s29
      %p70 = scmp.lt.s32.totalorder %s69, 0
      %s71 = scalar_select %p70, %s69, 0
      %s72 = ssub.s32 %s68, %s71
      %p73 = scmp.eq.s32.totalorder %s72, 0
      %s75 = sadd.s32 %s74, 1
      %s76 = scalar_select %p73, %s74, %s75
      %p79 = pneg %p73
      %p80 = scmp.eq.s32.totalorder %s14, 1
      %p81 = por %p79, %p80
      %p82 = scmp.ne.s32.totalorder %s74, %s77
      %p83 = scmp.eq.s32.totalorder %s14, 0
      %p84 = por %p82, %p83
      %p85 = scmp.ne.s32.totalorder %s74, %s77
      %p86 = scmp.eq.s32.totalorder %s19, 1
      %p87 = por %p85, %p86
      %p88 = scmp.ne.s32.totalorder %s77, %s78
      %p89 = scmp.eq.s32.totalorder %s19, 0
      %p90 = por %p88, %p89
      %p91 = scmp.ne.s32.totalorder %s77, %s78
      %p92 = scmp.eq.s32.totalorder %s20, 1
      %p93 = por %p91, %p92
      %p95 = scmp.ne.s32.totalorder %s78, %s94
      %p96 = scmp.eq.s32.totalorder %s20, 0
      %p97 = por %p95, %p96
      %s98 = ssub.s32 %s21, %s33
      %p99 = scmp.eq.s32.totalorder %s98, 0
      %s101 = sadd.s32 %s100, 1
      %s102 = scalar_select %p99, %s100, %s101
      %p105 = pneg %p99
      %p106 = scmp.eq.s32.totalorder %s14, 1
      %p107 = por %p105, %p106
      %p108 = scmp.ne.s32.totalorder %s100, %s103
      %p109 = scmp.eq.s32.totalorder %s14, 0
      %p110 = por %p108, %p109
      %p111 = scmp.ne.s32.totalorder %s100, %s103
      %p112 = scmp.eq.s32.totalorder %s19, 1
      %p113 = por %p111, %p112
      %p114 = scmp.ne.s32.totalorder %s103, %s104
      %p115 = scmp.eq.s32.totalorder %s19, 0
      %p116 = por %p114, %p115
      %p117 = scmp.ne.s32.totalorder %s103, %s104
      %p118 = scmp.eq.s32.totalorder %s20, 1
      %p119 = por %p117, %p118
      %p121 = scmp.ne.s32.totalorder %s104, %s120
      %p122 = scmp.eq.s32.totalorder %s20, 0
      %p123 = por %p121, %p122
      %p124 = scmp.le.s32.totalorder 1, %s14
      %p125 = scmp.lt.s32.totalorder %s14, 3
      %p126 = pnand %p124, %p125
      %p127 = pneg %p126
      // Predicated region
      $region9: #{tpu_custom_call.1} parent=5 // pred_check
        _
      $region10: #{tpu_custom_call.1} parent=5 // pred_check_branch
        %129 = sbr.rel (%p126) target = $region12
      $region11: #{tpu_custom_call.1} parent=5 // pred_region
        %s130 = ssub.s32 %s14, 1
      $region12: #{tpu_custom_call.1} parent=5 // pred_fallthru
        _
      %p131 = scmp.lt.s32.totalorder %s14, 2
      // Predicated region
      $region13: #{tpu_custom_call.1} parent=5 // pred_check
        %p132 = pneg %p131
      $region14: #{tpu_custom_call.1} parent=5 // pred_check_branch
        %134 = sbr.rel (%p132) target = $region16
      $region15: #{tpu_custom_call.1} parent=5 // pred_region
        // Predicated region
        $region17: #{tpu_custom_call.1} parent=15 // pred_check
          %p135 = pneg %p52
        $region18: #{tpu_custom_call.1} parent=15 // pred_check_branch
          %137 = sbr.rel (%p135) target = $region20
        $region19: #{tpu_custom_call.1} parent=15 // pred_region
          %s138 = sand.u32 %s42, 1
          %s139 = scalar_lea.sflag [#allocation4], %s138
          %s140 = sand.u32 %s42, 1
          %s141 = smul.addr %s140, 16
          %s142 = scalar_lea.vmem [#allocation3], %s141
          %s143 = sadd.s32 %s21, %s22
          %p144 = scmp.lt.s32.totalorder %s143, 0
          %s145 = scalar_select %p144, %s143, 0
          %s146 = smul.u32 2, %s145
          %s148 = ssub.s32 256, 256
          %149 = vsyncadd %s139, %s148
          %s150 = smul.addr %s146, 128
          %s151 = scalar_lea.hbm %s0, %s150
          %s152 = sshll.u32 %s142, 4
          %s153 = int_to_ptr.vmem [resolvable:$true] %s152
          %158 = dma.hbm_to_vmem [thread:$0]  %s151, 256, %s153, %s139, 128, 128, 8
        $region20: #{tpu_custom_call.1} parent=15 // pred_fallthru
          _
        // Predicated region
        $region21: #{tpu_custom_call.1} parent=15 // pred_check
          %p159 = pneg %p84
        $region22: #{tpu_custom_call.1} parent=15 // pred_check_branch
          %161 = sbr.rel (%p159) target = $region24
        $region23: #{tpu_custom_call.1} parent=15 // pred_region
          %s162 = sand.u32 %s74, 1
          %s163 = scalar_lea.sflag [#allocation6], %s162
          %s164 = sand.u32 %s74, 1
          %s165 = smul.addr %s164, 16
          %s166 = scalar_lea.vmem [#allocation5], %s165
          %s167 = sadd.s32 %s21, %s22
          %p168 = scmp.lt.s32.totalorder %s167, 0
          %s169 = scalar_select %p168, %s167, 0
          %s170 = smul.u32 2, %s169
          %s172 = ssub.s32 256, 256
          %173 = vsyncadd %s163, %s172
          %s174 = smul.addr %s170, 128
          %s175 = scalar_lea.hbm %s1, %s174
          %s176 = sshll.u32 %s166, 4
          %s177 = int_to_ptr.vmem [resolvable:$true] %s176
          %182 = dma.hbm_to_vmem [thread:$0]  %s175, 256, %s177, %s163, 128, 128, 8
        $region24: #{tpu_custom_call.1} parent=15 // pred_fallthru
          _
      $region16: #{tpu_custom_call.1} parent=5 // pred_fallthru
        _
      %p183 = scmp.le.s32.totalorder 1, %s14
      %p184 = scmp.lt.s32.totalorder %s14, 3
      %p185 = pnand %p183, %p184
      %p186 = pneg %p185
      // Predicated region
      $region25: #{tpu_custom_call.1} parent=5 // pred_check
        _
      $region26: #{tpu_custom_call.1} parent=5 // pred_check_branch
        %188 = sbr.rel (%p185) target = $region28
      $region27: #{tpu_custom_call.1} parent=5 // pred_region
        %s189 = ssub.s32 %s14, 1
        %s190 = sand.u32 %s45, 1
        %s191 = scalar_lea.sflag [#allocation4], %s190
        %s192 = sand.u32 %s45, 1
        %s193 = smul.addr %s192, 16
        %s194 = scalar_lea.vmem [#allocation3], %s193
        // Predicated region
        $region29: #{tpu_custom_call.1} parent=27 // pred_check
          %p195 = pneg %p58
        $region30: #{tpu_custom_call.1} parent=27 // pred_check_branch
          %197 = sbr.rel (%p195) target = $region32
        $region31: #{tpu_custom_call.1} parent=27 // pred_region
          %198 = dma.done %s191, 256
        $region32: #{tpu_custom_call.1} parent=27 // pred_fallthru
          _
        %s199 = sand.u32 %s77, 1
        %s200 = scalar_lea.sflag [#allocation6], %s199
        %s201 = sand.u32 %s77, 1
        %s202 = smul.addr %s201, 16
        %s203 = scalar_lea.vmem [#allocation5], %s202
        // Predicated region
        $region33: #{tpu_custom_call.1} parent=27 // pred_check
          %p204 = pneg %p90
        $region34: #{tpu_custom_call.1} parent=27 // pred_check_branch
          %206 = sbr.rel (%p204) target = $region36
        $region35: #{tpu_custom_call.1} parent=27 // pred_region
          %207 = dma.done %s200, 256
        $region36: #{tpu_custom_call.1} parent=27 // pred_fallthru
          _
        %s208 = sand.u32 %s45, 1
        %s209 = scalar_lea.sflag [#allocation4], %s208
        %s210 = sand.u32 %s45, 1
        %s211 = smul.addr %s210, 16
        %s212 = scalar_lea.vmem [#allocation3], %s211
        %p213 = pneg %p58
        %p214 = pneg %p55
        %s215 = sand.u32 %s77, 1
        %s216 = scalar_lea.sflag [#allocation6], %s215
        %s217 = sand.u32 %s77, 1
        %s218 = smul.addr %s217, 16
        %s219 = scalar_lea.vmem [#allocation5], %s218
        %p220 = pneg %p90
        %p221 = pneg %p87
        %p222 = pneg %p116
        %p223 = pneg %p113
        %p224 = scmp.lt.s32.totalorder %s23, 1
        %s225 = scalar_select %p224, %s23, 1
        %s226 = scalar_lea.vmem %s2, %s225
        %s227 = sadd.s32 %s23, %s24
        %p228 = scmp.lt.s32.totalorder %s227, 0
        %s229 = scalar_select %p228, %s227, 0
        %s230 = smul.u32 2, %s229
        %s231 = sadd.s32 %s23, %s24
        %p232 = scmp.lt.s32.totalorder %s231, 0
        %s233 = scalar_select %p232, %s231, 0
        %s234 = smul.u32 2, %s233
        %p235 = scmp.lt.s32.totalorder %s23, 1
        %s236 = scalar_select %p235, %s23, 1
        %s237 = scalar_lea.vmem %s2, %s236
        %p238 = scmp.eq.s32.totalorder %s24, 0
        // Predicated region
        $region37: #{tpu_custom_call.1} parent=27 // pred_check
          %p239 = pneg %p238
        $region38: #{tpu_custom_call.1} parent=27 // pred_check_branch
          %241 = sbr.rel (%p239) target = $region40
        $region39: #{tpu_custom_call.1} parent=27 // pred_region
          %242 = vst [vmem:[#allocation2] sm:$0xff] 0.0
        $region40: #{tpu_custom_call.1} parent=27 // pred_fallthru
          _
        %v243 = vld [vmem:[%s194] sm:$0xff]
        %v244 = vld [vmem:[%s194 + $0x8] sm:$0xff]
        %v245 = vld [vmem:[%s203] sm:$0xff]
        %v246 = vld [vmem:[%s203 + $0x8] sm:$0xff]
        %v247 = vsub.f32 %v243, %v245
        %v248 = vsub.f32 %v244, %v246
        %v249 = vmul.f32 %v247, %v247
        %v250 = vmul.f32 %v248, %v248
        %s251 = sadd.s32 %s23, %s24
        %s252 = smul.u32 %s251, 16
        %s253 = ssub.s32 16, %s252
        %v254 = vlaneseq
        %v255 = vshrl.u32 %v254, 7
        %v256 = vadd.s32 %v255, 8
        %v257 = vstv %s253
        %vm258 = vcmp.lt.s32.totalorder %v255, %v257
        %vm259 = vcmp.lt.s32.totalorder %v256, %v257
        %v260 = vsel %vm258, %v249, 0.0
        %v261 = vsel %vm259, %v250, 0.0
        %v262 = vld [vmem:[#allocation2] sm:$0xff]
        %v263 = vadd.f32 %v260, %v261
        %v264 = vadd.f32 %v262, %v263
        %265 = vst [vmem:[#allocation2] sm:$0xff] %v264
        // Predicated region
        $region41: #{tpu_custom_call.1} parent=27 // pred_check
          %p266 = pneg %p238
        $region42: #{tpu_custom_call.1} parent=27 // pred_check_branch
          %268 = sbr.rel (%p266) target = $region44
        $region43: #{tpu_custom_call.1} parent=27 // pred_region
          %v269 = vld [vmem:[#allocation2] sm:$0xff]
          %270 = vadd.xlane.f32.xlu0 %v269
          %v271 = vpop.xlane.xlu0 %270
          %v272 = vrot.slane %v271, 4
          %v273 = vadd.f32 %v271, %v272
          %v274 = vrot.slane %v273, 2
          %v275 = vadd.f32 %v273, %v274
          %v276 = vrot.slane %v275, 1
          %v277 = vadd.f32 %v275, %v276
          %s278 = vtos %v277
          %v279 = vstv %s278
          %vm280 = vcmask 0
          %281 = vst.msk [vmem:[%s237] sm:$0x1] %vm280, %v279
        $region44: #{tpu_custom_call.1} parent=27 // pred_fallthru
          _
        %p282 = scmp.lt.s32.totalorder %s23, 1
        %s283 = scalar_select %p282, %s23, 1
        %s284 = scalar_lea.vmem %s2, %s283
        // Predicated region
        $region45: #{tpu_custom_call.1} parent=27 // pred_check
          %p285 = pneg %p113
        $region46: #{tpu_custom_call.1} parent=27 // pred_check_branch
          %287 = sbr.rel (%p285) target = $region48
        $region47: #{tpu_custom_call.1} parent=27 // pred_region
          _
        $region48: #{tpu_custom_call.1} parent=27 // pred_fallthru
          _
      $region28: #{tpu_custom_call.1} parent=5 // pred_fallthru
        _
      %p288 = scmp.le.s32.totalorder 2, %s14
      // Predicated region
      $region49: #{tpu_custom_call.1} parent=5 // pred_check
        %p289 = pneg %p288
      $region50: #{tpu_custom_call.1} parent=5 // pred_check_branch
        %291 = sbr.rel (%p289) target = $region52
      $region51: #{tpu_custom_call.1} parent=5 // pred_region
        %s292 = ssub.s32 %s14, 2
        // Predicated region
        $region53: #{tpu_custom_call.1} parent=51 // pred_check
          %p293 = pneg %p119
        $region54: #{tpu_custom_call.1} parent=51 // pred_check_branch
          %295 = sbr.rel (%p293) target = $region56
        $region55: #{tpu_custom_call.1} parent=51 // pred_region
          %p296 = scmp.lt.s32.totalorder %s25, 1
          %s297 = scalar_select %p296, %s25, 1
          %s298 = scalar_lea.vmem %s2, %s297
        $region56: #{tpu_custom_call.1} parent=51 // pred_fallthru
          _
      $region52: #{tpu_custom_call.1} parent=5 // pred_fallthru
        _
    $region6: #{tpu_custom_call.1} parent=1 // loop_footer
      %s18 = sadd.s32 1, %s14
    $region7: #{tpu_custom_call.1} parent=1 // loop_footer_branch
      %13 = sbr.rel target = $region3
    $region8: #{tpu_custom_call.1} parent=1 // loop_exit
      _
    %299 = vsyncpa [#allocation4], 1
    %s300 = scalar_lea.sflag [#allocation4], 1
    %301 = vsyncpa %s300, 1
    %302 = vsyncpa [#allocation6], 1
    %s303 = scalar_lea.sflag [#allocation6], 1
    %304 = vsyncpa %s303, 1

</llo_original>
